<compile_context>
chip_gen: v6e
topology: v6e:2x2x1
jax: 0.10.0
libtpu: 0.0.40
codegen_flags: <defaults>
</compile_context>

<pallas_src>
import functools

import jax
import jax.numpy as jnp
from jax.experimental import pallas as pl
from jax.experimental.pallas import tpu as pltpu  # noqa: F401  (not needed at this size)


def _round_up(x, m):
    return ((x + m - 1) // m) * m


# ----------------------------- Pallas kernel -------------------------------- #
def _mlp_decoder_kernel(act_ref, w_ref, out_ref, *, num_modes, n_agents,
                        min_scale, uncertain):
    N = n_agents
    M = num_modes * N
    D = act_ref.shape[1]          # activation slab width (>= max(I, H))
    W = w_ref.shape[1]            # working lane width   (>= n_mid*H, out_w+1)

    # ---- unpack the single weight slab (static row offsets) ---------------- #
    vec = w_ref[0:8, :]                       # biases / LN gamma,beta / b3 / mask
    b1, g1, be1 = vec[0:1], vec[1:2], vec[2:3]
    b2, g2, be2 = vec[3:4], vec[4:5], vec[5:6]
    b3, is_scale = vec[6:7], vec[7:8]

    o = 8
    w1g = w_ref[o:o + D, :]; o += D           # stage-1 weight, global-input rows
    w1l = w_ref[o:o + D, :]; o += D           # stage-1 weight, local-input rows
    A   = w_ref[o:o + W, :]; o += W           # per-H-segment block-averaging matrix
    w2  = w_ref[o:o + W, :]; o += W           # stage-2 block-diagonal weight
    w3  = w_ref[o:o + W, :]                   # stage-3 weight (loc/scale interleaved + pi col)

    g = act_ref[0:M, :]                       # [M, D] global embed rows (mode-major)
    l = act_ref[M:M + N, :]                   # [N, D] local embed rows

    def seg_ln_relu(y, gamma, beta, eps=1e-5):
        # Segmented LayerNorm over H-wide lane blocks, no lane slicing:
        # mean / var broadcast back via the block-averaging matmul (MXU slack).
        mu = jnp.dot(y, A, preferred_element_type=jnp.float32)
        c = y - mu
        var = jnp.dot(c * c, A, preferred_element_type=jnp.float32)
        return jnp.maximum(c * jax.lax.rsqrt(var + eps) * gamma + beta, 0.0)

    # ---- stage 1: fused (aggr_embed linear | pi linear-1) ------------------ #
    lp = jnp.dot(l, w1l, preferred_element_type=jnp.float32)         # [N, W]
    lp_rep = jnp.concatenate([lp] * num_modes, axis=0)               # [M, W] static replication
    y1 = jnp.dot(g, w1g, preferred_element_type=jnp.float32) + lp_rep + b1
    y1n = seg_ln_relu(y1, g1, be1)            # cols [0:H]=aggr out, [H:2H]=pi hidden 1

    # ---- stage 2: fused (loc hidden | scale hidden | pi hidden-2) ---------- #
    y2 = jnp.dot(y1n, w2, preferred_element_type=jnp.float32) + b2
    y2n = seg_ln_relu(y2, g2, be2)

    # ---- stage 3: fused (loc out | scale out | pi out) ---------------------- #
    out = jnp.dot(y2n, w3, preferred_element_type=jnp.float32) + b3
    if uncertain:
        elu = jnp.where(out > 0.0, out, jnp.exp(jnp.minimum(out, 0.0)) - 1.0)
        out = jnp.where(is_scale > 0.0, elu + (1.0 + min_scale), out)
    out_ref[...] = out


# --------------------------- parameter utilities ----------------------------- #
def make_params(key, input_size, hidden_size, future_steps, uncertain=True):
    """Per-layer synthetic parameters with the PyTorch module's shapes."""
    I, H, F2 = input_size, hidden_size, future_steps * 2
    ks = jax.random.split(key, 13)

    def lin(k, fan_in, fan_out):
        kw, kb = jax.random.split(k)
        w = jax.random.normal(kw, (fan_in, fan_out), jnp.float32) / jnp.sqrt(float(fan_in))
        b = 0.1 * jax.random.normal(kb, (1, fan_out), jnp.float32)
        return w, b

    def ln(k, dim):
        kg, kb = jax.random.split(k)
        return (1.0 + 0.1 * jax.random.normal(kg, (1, dim), jnp.float32),
                0.1 * jax.random.normal(kb, (1, dim), jnp.float32))

    p = {}
    p["aggr_w"], p["aggr_b"] = lin(ks[0], I + H, H)
    p["aggr_g"], p["aggr_be"] = ln(ks[1], H)
    p["loc_w1"], p["loc_b1"] = lin(ks[2], H, H)
    p["loc_g1"], p["loc_be1"] = ln(ks[3], H)
    p["loc_w2"], p["loc_b2"] = lin(ks[4], H, F2)
    if uncertain:
        p["sc_w1"], p["sc_b1"] = lin(ks[5], H, H)
        p["sc_g1"], p["sc_be1"] = ln(ks[6], H)
        p["sc_w2"], p["sc_b2"] = lin(ks[7], H, F2)
    p["pi_w1"], p["pi_b1"] = lin(ks[8], H + I, H)
    p["pi_g1"], p["pi_be1"] = ln(ks[9], H)
    p["pi_w2"], p["pi_b2"] = lin(ks[10], H, H)
    p["pi_g2"], p["pi_be2"] = ln(ks[11], H)
    p["pi_w3"], p["pi_b3"] = lin(ks[12], H, 1)
    return p


def pack_params(p, *, input_size, hidden_size, future_steps, uncertain=True):
    """Pack all 26 small tensors into ONE weight slab (one-time, wrapper side)."""
    I, H, F = input_size, hidden_size, future_steps
    n_mid = 3 if uncertain else 2
    out_w = 4 * F if uncertain else 2 * F
    D = _round_up(max(I, H), 8)                       # activation slab width
    W = _round_up(max(n_mid * H, out_w + 1), 8)       # kernel working lane width

    def pad_to(a, rows, cols):
        return jnp.pad(a, ((0, rows - a.shape[0]), (0, cols - a.shape[1])))

    # stage-1 fused weight split into global-input / local-input row blocks.
    # cols [0:H] = aggr_embed linear (inputs ordered global,local)
    # cols [H:2H] = pi layer-1      (inputs ordered local,global)
    aggr_g, aggr_l = p["aggr_w"][:I], p["aggr_w"][I:]
    pi1_l, pi1_g = p["pi_w1"][:H], p["pi_w1"][H:]
    w1g = pad_to(jnp.concatenate([aggr_g, pi1_g], axis=1), D, W)
    w1l = pad_to(jnp.concatenate([aggr_l, pi1_l], axis=1), D, W)

    # block-averaging matrix for the segmented LayerNorms (H-wide blocks).
    lane = jnp.arange(W)
    seg = lane // H
    valid = lane < n_mid * H
    A = jnp.where((seg[:, None] == seg[None, :]) & valid[:, None] & valid[None, :],
                  jnp.float32(1.0 / H), jnp.float32(0.0))

    # stage-2 block-diagonal weight [W, W]:
    #   rows [0:H]   (aggr out h) -> [loc_w1 | sc_w1 | 0    ]
    #   rows [H:2H]  (pi hid p1)  -> [0      | 0     | pi_w2]
    zHH = jnp.zeros((H, H), jnp.float32)
    if uncertain:
        top = jnp.concatenate([p["loc_w1"], p["sc_w1"], zHH], axis=1)
        bot = jnp.concatenate([zHH, zHH, p["pi_w2"]], axis=1)
    else:
        top = jnp.concatenate([p["loc_w1"], zHH], axis=1)
        bot = jnp.concatenate([zHH, p["pi_w2"]], axis=1)
    w2 = pad_to(jnp.concatenate([top, bot], axis=0), W, W)

    # stage-3 weight: loc/scale columns interleaved (loc_x, loc_y, scale_x,
    # scale_y) per timestep, and the pi head folded in as column `out_w`.
    if uncertain:
        t = jnp.arange(F)
        perm = jnp.stack([2 * t, 2 * t + 1, 2 * F + 2 * t, 2 * F + 2 * t + 1],
                         axis=1).reshape(-1)
        zF = jnp.zeros((H, 2 * F), jnp.float32)
        ls_w = jnp.concatenate(
            [jnp.concatenate([p["loc_w2"], zF], axis=1),
             jnp.concatenate([zF, p["sc_w2"]], axis=1)], axis=0)[:, perm]   # [2H, 4F]
        ls_b = jnp.concatenate([p["loc_b2"], p["sc_b2"]], axis=1)[:, perm]  # [1, 4F]
    else:
        ls_w, ls_b = p["loc_w2"], p["loc_b2"]                               # [H, 2F]

    w3 = jnp.zeros((W, W), jnp.float32)
    w3 = w3.at[: ls_w.shape[0], :out_w].set(ls_w)
    w3 = w3.at[(n_mid - 1) * H: n_mid * H, out_w].set(p["pi_w3"][:, 0])
    b3 = jnp.zeros((1, W), jnp.float32)
    b3 = b3.at[:, :out_w].set(ls_b)
    b3 = b3.at[:, out_w].set(p["pi_b3"][:, 0])

    # vector rows [8, W]: biases / LN gamma,beta / b3+pi_b3 / precomputed mask.
    def row(*pieces):
        r = jnp.concatenate([x.reshape(1, -1) for x in pieces], axis=1)
        return jnp.pad(r, ((0, 0), (0, W - r.shape[1])))

    r_b1 = row(p["aggr_b"], p["pi_b1"])
    r_g1 = row(p["aggr_g"], p["pi_g1"])
    r_be1 = row(p["aggr_be"], p["pi_be1"])
    if uncertain:
        r_b2 = row(p["loc_b1"], p["sc_b1"], p["pi_b2"])
        r_g2 = row(p["loc_g1"], p["sc_g1"], p["pi_g2"])
        r_be2 = row(p["loc_be1"], p["sc_be1"], p["pi_be2"])
        c = jnp.arange(W)
        r_mask = jnp.where((c < out_w) & ((c % 4) >= 2), 1.0, 0.0).reshape(1, -1)
    else:
        r_b2 = row(p["loc_b1"], p["pi_b2"])
        r_g2 = row(p["loc_g1"], p["pi_g2"])
        r_be2 = row(p["loc_be1"], p["pi_be2"])
        r_mask = jnp.zeros((1, W), jnp.float32)
    vec = jnp.concatenate([r_b1, r_g1, r_be1, r_b2, r_g2, r_be2, b3, r_mask], axis=0)

    slab = jnp.concatenate([vec, w1g, w1l, A, w2, w3], axis=0).astype(jnp.float32)
    return {"slab": slab, "D": D, "W": W, "out_w": out_w}


# ------------------------------ forward wrapper ------------------------------ #
def mlp_decoder_forward(data, local_embed, global_embed, packed, *,
                        num_modes, future_steps, min_scale, uncertain=True):
    K, N, I = global_embed.shape
    H = local_embed.shape[-1]
    assert K == num_modes
    M = K * N
    F = future_steps
    D, W, out_w = packed["D"], packed["W"], packed["out_w"]

    # single activation slab: [M global rows || N local rows], width D.
    g_pad = jnp.pad(global_embed.reshape(M, I).astype(jnp.float32), ((0, 0), (0, D - I)))
    l_pad = jnp.pad(local_embed.astype(jnp.float32), ((0, 0), (0, D - H)))
    acts = jnp.concatenate([g_pad, l_pad], axis=0)                   # [M+N, D]

    kernel = functools.partial(
        _mlp_decoder_kernel, num_modes=K, n_agents=N,
        min_scale=float(min_scale), uncertain=bool(uncertain))

    out_slab = pl.pallas_call(
        kernel,
        out_shape=jax.ShapeDtypeStruct((M, W), jnp.float32),
    )(acts, packed["slab"])

    pi = out_slab[:, out_w].reshape(K, N).T                          # [N, num_modes]
    ls = out_slab[:, :out_w]
    if uncertain:
        out = {
            "loc": ls.reshape(K, N, F, 4),   # last dim = (loc_x, loc_y, scale_x, scale_y)
            "pi": pi,
            "local_embed": local_embed,
            "global_embed": global_embed,
        }
    else:
        out = {"loc": ls.reshape(K, N, F, 2), "pi": pi}
    out["reg_mask"] = ~data["padding_mask"][:, -F:]
    return out


# ------------------------- plain-JAX reference (check) ----------------------- #
def mlp_decoder_reference(data, local_embed, global_embed, p, *,
                          num_modes, future_steps, min_scale, uncertain=True):
    K, N, I = global_embed.shape
    H = local_embed.shape[-1]
    F = future_steps

    def ln(x, g, b, eps=1e-5):
        mu = x.mean(-1, keepdims=True)
        var = ((x - mu) ** 2).mean(-1, keepdims=True)
        return (x - mu) * jax.lax.rsqrt(var + eps) * g + b

    local_exp = jnp.broadcast_to(local_embed[None], (K, N, H))
    x_gl = jnp.concatenate([global_embed, local_exp], axis=-1)
    x_lg = jnp.concatenate([local_exp, global_embed], axis=-1)

    h = jnp.maximum(ln(x_gl @ p["aggr_w"] + p["aggr_b"], p["aggr_g"], p["aggr_be"]), 0.0)
    l1 = jnp.maximum(ln(h @ p["loc_w1"] + p["loc_b1"], p["loc_g1"], p["loc_be1"]), 0.0)
    loc = (l1 @ p["loc_w2"] + p["loc_b2"]).reshape(K, N, F, 2)

    p1 = jnp.maximum(ln(x_lg @ p["pi_w1"] + p["pi_b1"], p["pi_g1"], p["pi_be1"]), 0.0)
    p2 = jnp.maximum(ln(p1 @ p["pi_w2"] + p["pi_b2"], p["pi_g2"], p["pi_be2"]), 0.0)
    pi = (p2 @ p["pi_w3"] + p["pi_b3"])[..., 0].T

    if uncertain:
        s1 = jnp.maximum(ln(h @ p["sc_w1"] + p["sc_b1"], p["sc_g1"], p["sc_be1"]), 0.0)
        s = s1 @ p["sc_w2"] + p["sc_b2"]
        s = jnp.where(s > 0.0, s, jnp.exp(jnp.minimum(s, 0.0)) - 1.0) + 1.0 + min_scale
        scale = s.reshape(K, N, F, 2)
        out = {"loc": jnp.concatenate([loc, scale], axis=-1), "pi": pi,
               "local_embed": local_embed, "global_embed": global_embed}
    else:
        out = {"loc": loc, "pi": pi}
    out["reg_mask"] = ~data["padding_mask"][:, -F:]
    return out


# ---------------------------------- main ------------------------------------- #
if __name__ == "__main__":
    # module hyperparameters (kwargs of MLPDecoder.__init__)
    num_modes = 6
    global_channels = 32     # input_size
    local_channels = 32      # hidden_size
    future_steps = 8
    min_scale = 1e-3
    uncertain = True

    N = 4                    # number of agents
    T_hist = 12

    key = jax.random.PRNGKey(0)
    k_params, k_local, k_global, k_mask = jax.random.split(key, 4)

    params = make_params(k_params, global_channels, local_channels, future_steps,
                         uncertain=uncertain)
    packed = pack_params(params, input_size=global_channels,
                         hidden_size=local_channels,
                         future_steps=future_steps, uncertain=uncertain)

    local_embed = jax.random.normal(k_local, (N, local_channels), jnp.float32)
    global_embed = jax.random.normal(k_global, (num_modes, N, global_channels), jnp.float32)
    padding_mask = jax.random.bernoulli(k_mask, 0.2, (N, T_hist + future_steps))
    data = {"padding_mask": padding_mask}

    out = mlp_decoder_forward(
        data, local_embed, global_embed, packed,
        num_modes=num_modes, future_steps=future_steps,
        min_scale=min_scale, uncertain=uncertain)
    jax.block_until_ready(out)

    assert out["loc"].shape == (num_modes, N, future_steps, 4)
    assert out["pi"].shape == (N, num_modes)
    assert out["reg_mask"].shape == (N, future_steps)

    # numerical check against a plain-JAX transcription of the PyTorch module
    ref = mlp_decoder_reference(
        data, local_embed, global_embed, params,
        num_modes=num_modes, future_steps=future_steps,
        min_scale=min_scale, uncertain=uncertain)
    assert jnp.allclose(out["loc"], ref["loc"], atol=1e-3, rtol=1e-3)
    assert jnp.allclose(out["pi"], ref["pi"], atol=1e-3, rtol=1e-3)
    assert jnp.array_equal(out["reg_mask"], ref["reg_mask"])

    print("KERNEL_OK")
</pallas_src>

<mosaic_0001>
module attributes {stable_mosaic.version = 11 : i64} {
  func.func @_mlp_decoder_kernel(%arg0: memref<28x32xf32, #tpu.memory_space<vmem>>, %arg1: memref<360x96xf32, #tpu.memory_space<vmem>>, %arg2: memref<24x96xf32, #tpu.memory_space<vmem>>) attributes {dimension_semantics = [], scalar_prefetch = 0 : i64, scratch_operands = 0 : i64, tpu.core_type = #tpu.core_type<tc>} {
    %c0 = arith.constant 0 : index
    %c0_0 = arith.constant 0 : index
    %0 = vector.load %arg1[%c0, %c0_0] : memref<360x96xf32, #tpu.memory_space<vmem>>, vector<8x96xf32>
    %1 = vector.extract_strided_slice %0 {offsets = [0, 0], sizes = [1, 96], strides = [1, 1]} : vector<8x96xf32> to vector<1x96xf32>
    %2 = vector.extract_strided_slice %0 {offsets = [1, 0], sizes = [1, 96], strides = [1, 1]} : vector<8x96xf32> to vector<1x96xf32>
    %3 = vector.extract_strided_slice %0 {offsets = [2, 0], sizes = [1, 96], strides = [1, 1]} : vector<8x96xf32> to vector<1x96xf32>
    %4 = vector.extract_strided_slice %0 {offsets = [3, 0], sizes = [1, 96], strides = [1, 1]} : vector<8x96xf32> to vector<1x96xf32>
    %5 = vector.extract_strided_slice %0 {offsets = [4, 0], sizes = [1, 96], strides = [1, 1]} : vector<8x96xf32> to vector<1x96xf32>
    %6 = vector.extract_strided_slice %0 {offsets = [5, 0], sizes = [1, 96], strides = [1, 1]} : vector<8x96xf32> to vector<1x96xf32>
    %7 = vector.extract_strided_slice %0 {offsets = [6, 0], sizes = [1, 96], strides = [1, 1]} : vector<8x96xf32> to vector<1x96xf32>
    %8 = vector.extract_strided_slice %0 {offsets = [7, 0], sizes = [1, 96], strides = [1, 1]} : vector<8x96xf32> to vector<1x96xf32>
    %c8 = arith.constant 8 : index
    %c0_1 = arith.constant 0 : index
    %9 = vector.load %arg1[%c8, %c0_1] : memref<360x96xf32, #tpu.memory_space<vmem>>, vector<32x96xf32>
    %c40 = arith.constant 40 : index
    %c0_2 = arith.constant 0 : index
    %10 = vector.load %arg1[%c40, %c0_2] : memref<360x96xf32, #tpu.memory_space<vmem>>, vector<32x96xf32>
    %c72 = arith.constant 72 : index
    %c0_3 = arith.constant 0 : index
    %11 = vector.load %arg1[%c72, %c0_3] : memref<360x96xf32, #tpu.memory_space<vmem>>, vector<96x96xf32>
    %c168 = arith.constant 168 : index
    %c0_4 = arith.constant 0 : index
    %12 = vector.load %arg1[%c168, %c0_4] : memref<360x96xf32, #tpu.memory_space<vmem>>, vector<96x96xf32>
    %c264 = arith.constant 264 : index
    %c0_5 = arith.constant 0 : index
    %13 = vector.load %arg1[%c264, %c0_5] : memref<360x96xf32, #tpu.memory_space<vmem>>, vector<96x96xf32>
    %c0_6 = arith.constant 0 : index
    %c0_7 = arith.constant 0 : index
    %14 = vector.load %arg0[%c0_6, %c0_7] : memref<28x32xf32, #tpu.memory_space<vmem>>, vector<24x32xf32>
    %c24 = arith.constant 24 : index
    %c0_8 = arith.constant 0 : index
    %15 = vector.load %arg0[%c24, %c0_8] : memref<28x32xf32, #tpu.memory_space<vmem>>, vector<4x32xf32>
    %cst = arith.constant dense<0.000000e+00> : vector<4x96xf32>
    %16 = tpu.matmul %15, %10, %cst {dimension_numbers = #tpu.dot_dimension_numbers<[1], [0], [0], [1], [0, 0, 1, 1], [], []>} : vector<4x32xf32>, vector<32x96xf32>, vector<4x96xf32> -> vector<4x96xf32>
    %17 = tpu.concatenate %16, %16, %16, %16, %16, %16 in 0 : vector<4x96xf32>, vector<4x96xf32>, vector<4x96xf32>, vector<4x96xf32>, vector<4x96xf32>, vector<4x96xf32> -> vector<24x96xf32>
    %cst_9 = arith.constant dense<0.000000e+00> : vector<24x96xf32>
    %18 = tpu.matmul %14, %9, %cst_9 {dimension_numbers = #tpu.dot_dimension_numbers<[1], [0], [0], [1], [0, 0, 1, 1], [], []>} : vector<24x32xf32>, vector<32x96xf32>, vector<24x96xf32> -> vector<24x96xf32>
    %19 = arith.addf %18, %17 : vector<24x96xf32>
    %20 = vector.broadcast %1 : vector<1x96xf32> to vector<24x96xf32>
    %21 = arith.addf %19, %20 : vector<24x96xf32>
    %cst_10 = arith.constant dense<0.000000e+00> : vector<24x96xf32>
    %22 = tpu.matmul %21, %11, %cst_10 {dimension_numbers = #tpu.dot_dimension_numbers<[1], [0], [0], [1], [0, 0, 1, 1], [], []>} : vector<24x96xf32>, vector<96x96xf32>, vector<24x96xf32> -> vector<24x96xf32>
    %23 = arith.subf %21, %22 : vector<24x96xf32>
    %24 = arith.mulf %23, %23 : vector<24x96xf32>
    %cst_11 = arith.constant dense<0.000000e+00> : vector<24x96xf32>
    %25 = tpu.matmul %24, %11, %cst_11 {dimension_numbers = #tpu.dot_dimension_numbers<[1], [0], [0], [1], [0, 0, 1, 1], [], []>} : vector<24x96xf32>, vector<96x96xf32>, vector<24x96xf32> -> vector<24x96xf32>
    %cst_12 = arith.constant 9.99999974E-6 : f32
    %26 = vector.broadcast %cst_12 : f32 to vector<24x96xf32>
    %27 = arith.addf %25, %26 : vector<24x96xf32>
    %28 = math.rsqrt %27 : vector<24x96xf32>
    %29 = arith.mulf %23, %28 : vector<24x96xf32>
    %30 = vector.broadcast %2 : vector<1x96xf32> to vector<24x96xf32>
    %31 = arith.mulf %29, %30 : vector<24x96xf32>
    %32 = vector.broadcast %3 : vector<1x96xf32> to vector<24x96xf32>
    %33 = arith.addf %31, %32 : vector<24x96xf32>
    %cst_13 = arith.constant 0.000000e+00 : f32
    %34 = vector.broadcast %cst_13 : f32 to vector<24x96xf32>
    %35 = arith.maximumf %33, %34 : vector<24x96xf32>
    %cst_14 = arith.constant dense<0.000000e+00> : vector<24x96xf32>
    %36 = tpu.matmul %35, %12, %cst_14 {dimension_numbers = #tpu.dot_dimension_numbers<[1], [0], [0], [1], [0, 0, 1, 1], [], []>} : vector<24x96xf32>, vector<96x96xf32>, vector<24x96xf32> -> vector<24x96xf32>
    %37 = vector.broadcast %4 : vector<1x96xf32> to vector<24x96xf32>
    %38 = arith.addf %36, %37 : vector<24x96xf32>
    %cst_15 = arith.constant dense<0.000000e+00> : vector<24x96xf32>
    %39 = tpu.matmul %38, %11, %cst_15 {dimension_numbers = #tpu.dot_dimension_numbers<[1], [0], [0], [1], [0, 0, 1, 1], [], []>} : vector<24x96xf32>, vector<96x96xf32>, vector<24x96xf32> -> vector<24x96xf32>
    %40 = arith.subf %38, %39 : vector<24x96xf32>
    %41 = arith.mulf %40, %40 : vector<24x96xf32>
    %cst_16 = arith.constant dense<0.000000e+00> : vector<24x96xf32>
    %42 = tpu.matmul %41, %11, %cst_16 {dimension_numbers = #tpu.dot_dimension_numbers<[1], [0], [0], [1], [0, 0, 1, 1], [], []>} : vector<24x96xf32>, vector<96x96xf32>, vector<24x96xf32> -> vector<24x96xf32>
    %cst_17 = arith.constant 9.99999974E-6 : f32
    %43 = vector.broadcast %cst_17 : f32 to vector<24x96xf32>
    %44 = arith.addf %42, %43 : vector<24x96xf32>
    %45 = math.rsqrt %44 : vector<24x96xf32>
    %46 = arith.mulf %40, %45 : vector<24x96xf32>
    %47 = vector.broadcast %5 : vector<1x96xf32> to vector<24x96xf32>
    %48 = arith.mulf %46, %47 : vector<24x96xf32>
    %49 = vector.broadcast %6 : vector<1x96xf32> to vector<24x96xf32>
    %50 = arith.addf %48, %49 : vector<24x96xf32>
    %cst_18 = arith.constant 0.000000e+00 : f32
    %51 = vector.broadcast %cst_18 : f32 to vector<24x96xf32>
    %52 = arith.maximumf %50, %51 : vector<24x96xf32>
    %cst_19 = arith.constant dense<0.000000e+00> : vector<24x96xf32>
    %53 = tpu.matmul %52, %13, %cst_19 {dimension_numbers = #tpu.dot_dimension_numbers<[1], [0], [0], [1], [0, 0, 1, 1], [], []>} : vector<24x96xf32>, vector<96x96xf32>, vector<24x96xf32> -> vector<24x96xf32>
    %54 = vector.broadcast %7 : vector<1x96xf32> to vector<24x96xf32>
    %55 = arith.addf %53, %54 : vector<24x96xf32>
    %cst_20 = arith.constant 0.000000e+00 : f32
    %56 = vector.broadcast %cst_20 : f32 to vector<24x96xf32>
    %57 = arith.cmpf ogt, %55, %56 : vector<24x96xf32>
    %cst_21 = arith.constant 0.000000e+00 : f32
    %58 = vector.broadcast %cst_21 : f32 to vector<24x96xf32>
    %59 = arith.minimumf %55, %58 : vector<24x96xf32>
    %60 = math.exp %59 : vector<24x96xf32>
    %cst_22 = arith.constant 1.000000e+00 : f32
    %61 = vector.broadcast %cst_22 : f32 to vector<24x96xf32>
    %62 = arith.subf %60, %61 : vector<24x96xf32>
    %63 = arith.select %57, %55, %62 : vector<24x96xi1>, vector<24x96xf32>
    %cst_23 = arith.constant 0.000000e+00 : f32
    %64 = vector.broadcast %cst_23 : f32 to vector<1x96xf32>
    %65 = arith.cmpf ogt, %8, %64 : vector<1x96xf32>
    %cst_24 = arith.constant 1.001000e+00 : f32
    %66 = vector.broadcast %cst_24 : f32 to vector<24x96xf32>
    %67 = arith.addf %63, %66 : vector<24x96xf32>
    %68 = vector.shape_cast %65 : vector<1x96xi1> to vector<1x96xi1>
    %69 = vector.broadcast %68 : vector<1x96xi1> to vector<24x96xi1>
    %70 = arith.select %69, %67, %55 : vector<24x96xi1>, vector<24x96xf32>
    %c0_25 = arith.constant 0 : index
    %c0_26 = arith.constant 0 : index
    %71 = vector.load %arg2[%c0_25, %c0_26] : memref<24x96xf32, #tpu.memory_space<vmem>>, vector<24x96xf32>
    tpu.vector_store %arg2[%c0_25, %c0_26], %70 {strides = array<i32>} : memref<24x96xf32, #tpu.memory_space<vmem>>, vector<24x96xf32>,
    return
  }
}

</mosaic_0001>

<llo_original>
// kernel: tpu_custom_call.1
$region0: #{tpu_custom_call.1}
  #allocation0 [shape = 'u32[]', space=smem, size = 0x4, offset = 0x4, fixed_abs, tag = 'smem constant byte address 0x4 - core index']
  #allocation1 [shape = 'u32[144,128]{1,0:T(1,128)}', space=vmem, size = 0x12000, scoped, tag = 'internal scratch']
  %s0 = inlined_call_operand.vmem [shape: f32[28,32], index: 0, kind: input, shape index: {}]
  %s1 = inlined_call_operand.vmem [shape: f32[360,96], index: 1, kind: input, shape index: {}]
  %s2 = inlined_call_operand.hbm [shape: f32[24,96], index: 2, kind: output, shape index: {}]
  %s3 = sld [smem:[#allocation0]]
  $region18: #{tpu_custom_call.1} parent=0
    _
  %s5 = ssub.s32 1, %s3
  %s6 = scalar_select 0, %s5, %s3
  $region1: #{tpu_custom_call.1} parent=0
    #allocation2 [shape = 'u8[12288]{0}', space=vmem, size = 0x3000, scoped, tag = 'output window, operand 0, single buffered']
    #allocation3 [shape = 's32[1]{0}', space=sflag, size = 0x4, scoped, tag = 'scoped memory for tpu_custom_call.1']
    %7 = vsyncpa [#allocation3], 0
    // Predicated region
    $region2: #{tpu_custom_call.1} parent=1 // pred_check
      _
    $region3: #{tpu_custom_call.1} parent=1 // pred_check_branch
      %9 = sbr.rel (0) target = $region5
    $region4: #{tpu_custom_call.1} parent=1 // pred_region
      _
    $region5: #{tpu_custom_call.1} parent=1 // pred_fallthru
      _
    // Predicated region
    $region6: #{tpu_custom_call.1} parent=1 // pred_check
      _
    $region7: #{tpu_custom_call.1} parent=1 // pred_check_branch
      %11 = sbr.rel (0) target = $region9
    $region8: #{tpu_custom_call.1} parent=1 // pred_region
      _
    $region9: #{tpu_custom_call.1} parent=1 // pred_fallthru
      _
    %v12 = vld [vmem:[%s1] sm:$0xff]
    %v13 = vld [vmem:[%s1 + $0x8] sm:$0xff]
    %v14 = vld [vmem:[%s1 + $0x10] sm:$0xff]
    %v15 = vld [vmem:[%s1 + $0x18] sm:$0xff]
    %v16 = vld [vmem:[%s1 + $0x20] sm:$0xff]
    %v17 = vld [vmem:[%s1 + $0x28] sm:$0xff]
    %v18 = vld [vmem:[%s1 + $0x30] sm:$0xff]
    %v19 = vld [vmem:[%s1 + $0x38] sm:$0xff]
    %v20 = vld [vmem:[%s1 + $0x40] sm:$0xff]
    %v21 = vld [vmem:[%s1 + $0x48] sm:$0xff]
    %v22 = vld [vmem:[%s1 + $0x50] sm:$0xff]
    %v23 = vld [vmem:[%s1 + $0x58] sm:$0xff]
    %v24 = vld [vmem:[%s1 + $0x60] sm:$0xff]
    %v25 = vld [vmem:[%s1 + $0x68] sm:$0xff]
    %v26 = vld [vmem:[%s1 + $0x70] sm:$0xff]
    %v27 = vld [vmem:[%s1 + $0x78] sm:$0xff]
    %v28 = vld [vmem:[%s1 + $0x80] sm:$0xff]
    %v29 = vld [vmem:[%s1 + $0x88] sm:$0xff]
    %v30 = vld [vmem:[%s1 + $0x90] sm:$0xff]
    %v31 = vld [vmem:[%s1 + $0x98] sm:$0xff]
    %v32 = vld [vmem:[%s1 + $0xa0] sm:$0xff]
    %v33 = vld [vmem:[%s1 + $0xa8] sm:$0xff]
    %v34 = vld [vmem:[%s1 + $0xb0] sm:$0xff]
    %v35 = vld [vmem:[%s1 + $0xb8] sm:$0xff]
    %v36 = vld [vmem:[%s1 + $0xc0] sm:$0xff]
    %v37 = vld [vmem:[%s1 + $0xc8] sm:$0xff]
    %v38 = vld [vmem:[%s1 + $0xd0] sm:$0xff]
    %v39 = vld [vmem:[%s1 + $0xd8] sm:$0xff]
    %v40 = vld [vmem:[%s1 + $0xe0] sm:$0xff]
    %v41 = vld [vmem:[%s1 + $0xe8] sm:$0xff]
    %v42 = vld [vmem:[%s1 + $0xf0] sm:$0xff]
    %v43 = vld [vmem:[%s1 + $0xf8] sm:$0xff]
    %v44 = vld [vmem:[%s1 + $0x100] sm:$0xff]
    %v45 = vld [vmem:[%s1 + $0x108] sm:$0xff]
    %v46 = vld [vmem:[%s1 + $0x110] sm:$0xff]
    %v47 = vld [vmem:[%s1 + $0x118] sm:$0xff]
    %v48 = vld [vmem:[%s1 + $0x120] sm:$0xff]
    %v49 = vld [vmem:[%s1 + $0x128] sm:$0xff]
    %v50 = vld [vmem:[%s1 + $0x130] sm:$0xff]
    %v51 = vld [vmem:[%s1 + $0x138] sm:$0xff]
    %v52 = vld [vmem:[%s1 + $0x140] sm:$0xff]
    %v53 = vld [vmem:[%s1 + $0x148] sm:$0xff]
    %v54 = vld [vmem:[%s1 + $0x150] sm:$0xff]
    %v55 = vld [vmem:[%s1 + $0x158] sm:$0xff]
    %v56 = vld [vmem:[%s1 + $0x160] sm:$0xff]
    %v57 = vld [vmem:[%s0] sm:$0xff]
    %v58 = vld [vmem:[%s0 + $0x8] sm:$0xff]
    %v59 = vld [vmem:[%s0 + $0x10] sm:$0xff]
    %v60 = vld [vmem:[%s0 + $0x18] sm:$0xf]
    %vm61 = vcmask 261120
    %v63 = vsel %vm61, %v60, 0
    %65 = vmatprep.subr.mxu0 0.0
    %66 = vmatpush1.msra.mxu0 0.0
    %67 = vmatprep.subr.mxu0 0.0
    %68 = vmatpush1.msra.mxu0 0.0
    %69 = vmatprep.subr.mxu0 0.0
    %70 = vmatpush1.msra.mxu0 0.0
    %71 = vmatprep.subr.mxu0 0.0
    %72 = vmatpush1.msra.mxu0 0.0
    %73 = vmatprep.subr.mxu0 0.0
    %74 = vmatpush1.msra.mxu0 0.0
    %75 = vmatprep.subr.mxu0 0.0
    %76 = vmatpush1.msra.mxu0 0.0
    %77 = vmatprep.subr.mxu0 0.0
    %78 = vmatpush1.msra.mxu0 0.0
    %79 = vmatprep.subr.mxu0 0.0
    %80 = vmatpush1.msra.mxu0 0.0
    %81 = vmatprep.subr.mxu0 0.0
    %82 = vmatpush1.msra.mxu0 0.0
    %83 = vmatprep.subr.mxu0 0.0
    %84 = vmatpush1.msra.mxu0 0.0
    %85 = vmatprep.subr.mxu0 0.0
    %86 = vmatpush1.msra.mxu0 0.0
    %87 = vmatprep.subr.mxu0 0.0
    %88 = vmatpush1.msra.mxu0 0.0
    %89 = vmatprep.subr.mxu0 0.0
    %90 = vmatpush1.msra.mxu0 %v20
    %91 = vmatprep.subr.mxu0 0.0
    %92 = vmatpush1.msra.mxu0 %v19
    %93 = vmatprep.subr.mxu0 0.0
    %94 = vmatpush1.msra.mxu0 %v18
    %95 = vmatprep.subr.mxu0 0.0
    %96 = vmatpush1.msra.mxu0 %v17
    %97 = vmatprep.subr.mxu0 0.0
    %98 = vmatpush2.msra.mxu0 0.0
    %99 = vmatprep.subr.mxu0 0.0
    %100 = vmatpush2.msra.mxu0 0.0
    %101 = vmatprep.subr.mxu0 0.0
    %102 = vmatpush2.msra.mxu0 0.0
    %103 = vmatprep.subr.mxu0 0.0
    %104 = vmatpush2.msra.mxu0 0.0
    %105 = vmatprep.subr.mxu0 0.0
    %106 = vmatpush2.msra.mxu0 0.0
    %107 = vmatprep.subr.mxu0 0.0
    %108 = vmatpush2.msra.mxu0 0.0
    %109 = vmatprep.subr.mxu0 0.0
    %110 = vmatpush2.msra.mxu0 0.0
    %111 = vmatprep.subr.mxu0 0.0
    %112 = vmatpush2.msra.mxu0 0.0
    %113 = vmatprep.subr.mxu0 0.0
    %114 = vmatpush2.msra.mxu0 0.0
    %115 = vmatprep.subr.mxu0 0.0
    %116 = vmatpush2.msra.mxu0 0.0
    %117 = vmatprep.subr.mxu0 0.0
    %118 = vmatpush2.msra.mxu0 0.0
    %119 = vmatprep.subr.mxu0 0.0
    %120 = vmatpush2.msra.mxu0 0.0
    %121 = vmatprep.subr.mxu0 0.0
    %122 = vmatpush2.msra.mxu0 0.0
    %123 = vmatprep.subr.mxu0 0.0
    %124 = vmatpush2.msra.mxu0 0.0
    %125 = vmatprep.subr.mxu0 0.0
    %126 = vmatpush2.msra.mxu0 0.0
    %127 = vmatprep.subr.mxu0 0.0
    %128 = vmatpush2.msra.mxu0 0.0
    %129 = vmatprep.mubr.f32.mxu0 0.0
    %130 = vmatmul.mubr.f32.gmra.mxu0 %v63
    %v131 = vpop.f32.mrf.mxu0
    %v132 = vadd.f32 0.0, %v131
    %v133 = vpop.f32.mrf.mxu0
    %134 = vdwg.mxu0
    %v136 = vrot.slane %v132, 4
    %vm138 = vcmask 1043456
    %v139 = vsel %vm138, %v132, %v136
    %v141 = vsel %vm61, %v57, 0
    %v144 = vsel %vm61, %v58, 0
    %v147 = vsel %vm61, %v59, 0
    %149 = vmatprep.subr.mxu0 0.0
    %150 = vmatpush1.msra.mxu0 0.0
    %151 = vmatprep.subr.mxu0 0.0
    %152 = vmatpush1.msra.mxu0 0.0
    %153 = vmatprep.subr.mxu0 0.0
    %154 = vmatpush1.msra.mxu0 0.0
    %155 = vmatprep.subr.mxu0 0.0
    %156 = vmatpush1.msra.mxu0 0.0
    %157 = vmatprep.subr.mxu0 0.0
    %158 = vmatpush1.msra.mxu0 0.0
    %159 = vmatprep.subr.mxu0 0.0
    %160 = vmatpush1.msra.mxu0 0.0
    %161 = vmatprep.subr.mxu0 0.0
    %162 = vmatpush1.msra.mxu0 0.0
    %163 = vmatprep.subr.mxu0 0.0
    %164 = vmatpush1.msra.mxu0 0.0
    %165 = vmatprep.subr.mxu0 0.0
    %166 = vmatpush1.msra.mxu0 0.0
    %167 = vmatprep.subr.mxu0 0.0
    %168 = vmatpush1.msra.mxu0 0.0
    %169 = vmatprep.subr.mxu0 0.0
    %170 = vmatpush1.msra.mxu0 0.0
    %171 = vmatprep.subr.mxu0 0.0
    %172 = vmatpush1.msra.mxu0 0.0
    %173 = vmatprep.subr.mxu0 0.0
    %174 = vmatpush1.msra.mxu0 %v16
    %175 = vmatprep.subr.mxu0 0.0
    %176 = vmatpush1.msra.mxu0 %v15
    %177 = vmatprep.subr.mxu0 0.0
    %178 = vmatpush1.msra.mxu0 %v14
    %179 = vmatprep.subr.mxu0 0.0
    %180 = vmatpush1.msra.mxu0 %v13
    %181 = vmatprep.subr.mxu0 0.0
    %182 = vmatpush2.msra.mxu0 0.0
    %183 = vmatprep.subr.mxu0 0.0
    %184 = vmatpush2.msra.mxu0 0.0
    %185 = vmatprep.subr.mxu0 0.0
    %186 = vmatpush2.msra.mxu0 0.0
    %187 = vmatprep.subr.mxu0 0.0
    %188 = vmatpush2.msra.mxu0 0.0
    %189 = vmatprep.subr.mxu0 0.0
    %190 = vmatpush2.msra.mxu0 0.0
    %191 = vmatprep.subr.mxu0 0.0
    %192 = vmatpush2.msra.mxu0 0.0
    %193 = vmatprep.subr.mxu0 0.0
    %194 = vmatpush2.msra.mxu0 0.0
    %195 = vmatprep.subr.mxu0 0.0
    %196 = vmatpush2.msra.mxu0 0.0
    %197 = vmatprep.subr.mxu0 0.0
    %198 = vmatpush2.msra.mxu0 0.0
    %199 = vmatprep.subr.mxu0 0.0
    %200 = vmatpush2.msra.mxu0 0.0
    %201 = vmatprep.subr.mxu0 0.0
    %202 = vmatpush2.msra.mxu0 0.0
    %203 = vmatprep.subr.mxu0 0.0
    %204 = vmatpush2.msra.mxu0 0.0
    %205 = vmatprep.subr.mxu0 0.0
    %206 = vmatpush2.msra.mxu0 0.0
    %207 = vmatprep.subr.mxu0 0.0
    %208 = vmatpush2.msra.mxu0 0.0
    %209 = vmatprep.subr.mxu0 0.0
    %210 = vmatpush2.msra.mxu0 0.0
    %211 = vmatprep.subr.mxu0 0.0
    %212 = vmatpush2.msra.mxu0 0.0
    %213 = vmatprep.mubr.f32.mxu0 0.0
    %214 = vmatmul.mubr.f32.gmra.mxu0 %v141
    %v215 = vpop.f32.mrf.mxu0
    %v216 = vadd.f32 %v139, %v215
    %v217 = vpop.f32.mrf.mxu0
    %218 = vmatprep.mubr.f32.mxu0 0.0
    %219 = vmatmul.mubr.f32.gmra.mxu0 %v144
    %v220 = vpop.f32.mrf.mxu0
    %v221 = vadd.f32 %v139, %v220
    %v222 = vpop.f32.mrf.mxu0
    %223 = vmatprep.mubr.f32.mxu0 0.0
    %224 = vmatmul.mubr.f32.gmra.mxu0 %v147
    %v225 = vpop.f32.mrf.mxu0
    %v226 = vadd.f32 %v139, %v225
    %v227 = vpop.f32.mrf.mxu0
    %228 = vdwg.mxu0
    %v229 = vlaneseq
    %v230 = vshrl.u32 %v229, 7
    %v231 = vsub.s32 0, %v230
    %v232 = vrot.slane %v12, %v231
    %v233 = vadd.f32 %v216, %v232
    %v234 = vadd.f32 %v221, %v232
    %v235 = vadd.f32 %v226, %v232
    %vm236 = vcmask 785408
    %v238 = vsel %vm236, %v233, 0
    %v241 = vsel %vm236, %v234, 0
    %v244 = vsel %vm236, %v235, 0
    %246 = vmatprep.subr.mxu0 0.0
    %247 = vmatpush1.msra.mxu0 0.0
    %248 = vmatprep.subr.mxu0 0.0
    %249 = vmatpush1.msra.mxu0 0.0
    %250 = vmatprep.subr.mxu0 0.0
    %251 = vmatpush1.msra.mxu0 0.0
    %252 = vmatprep.subr.mxu0 0.0
    %253 = vmatpush1.msra.mxu0 0.0
    %254 = vmatprep.subr.mxu0 0.0
    %255 = vmatpush1.msra.mxu0 %v32
    %256 = vmatprep.subr.mxu0 0.0
    %257 = vmatpush1.msra.mxu0 %v31
    %258 = vmatprep.subr.mxu0 0.0
    %259 = vmatpush1.msra.mxu0 %v30
    %260 = vmatprep.subr.mxu0 0.0
    %261 = vmatpush1.msra.mxu0 %v29
    %262 = vmatprep.subr.mxu0 0.0
    %263 = vmatpush1.msra.mxu0 %v28
    %264 = vmatprep.subr.mxu0 0.0
    %265 = vmatpush1.msra.mxu0 %v27
    %266 = vmatprep.subr.mxu0 0.0
    %267 = vmatpush1.msra.mxu0 %v26
    %268 = vmatprep.subr.mxu0 0.0
    %269 = vmatpush1.msra.mxu0 %v25
    %270 = vmatprep.subr.mxu0 0.0
    %271 = vmatpush1.msra.mxu0 %v24
    %272 = vmatprep.subr.mxu0 0.0
    %273 = vmatpush1.msra.mxu0 %v23
    %274 = vmatprep.subr.mxu0 0.0
    %275 = vmatpush1.msra.mxu0 %v22
    %276 = vmatprep.subr.mxu0 0.0
    %277 = vmatpush1.msra.mxu0 %v21
    %278 = vmatprep.subr.mxu0 0.0
    %279 = vmatpush2.msra.mxu0 0.0
    %280 = vmatprep.subr.mxu0 0.0
    %281 = vmatpush2.msra.mxu0 0.0
    %282 = vmatprep.subr.mxu0 0.0
    %283 = vmatpush2.msra.mxu0 0.0
    %284 = vmatprep.subr.mxu0 0.0
    %285 = vmatpush2.msra.mxu0 0.0
    %286 = vmatprep.subr.mxu0 0.0
    %287 = vmatpush2.msra.mxu0 0.0
    %288 = vmatprep.subr.mxu0 0.0
    %289 = vmatpush2.msra.mxu0 0.0
    %290 = vmatprep.subr.mxu0 0.0
    %291 = vmatpush2.msra.mxu0 0.0
    %292 = vmatprep.subr.mxu0 0.0
    %293 = vmatpush2.msra.mxu0 0.0
    %294 = vmatprep.subr.mxu0 0.0
    %295 = vmatpush2.msra.mxu0 0.0
    %296 = vmatprep.subr.mxu0 0.0
    %297 = vmatpush2.msra.mxu0 0.0
    %298 = vmatprep.subr.mxu0 0.0
    %299 = vmatpush2.msra.mxu0 0.0
    %300 = vmatprep.subr.mxu0 0.0
    %301 = vmatpush2.msra.mxu0 0.0
    %302 = vmatprep.subr.mxu0 0.0
    %303 = vmatpush2.msra.mxu0 0.0
    %304 = vmatprep.subr.mxu0 0.0
    %305 = vmatpush2.msra.mxu0 0.0
    %306 = vmatprep.subr.mxu0 0.0
    %307 = vmatpush2.msra.mxu0 0.0
    %308 = vmatprep.subr.mxu0 0.0
    %309 = vmatpush2.msra.mxu0 0.0
    %310 = vmatprep.mubr.f32.mxu0 0.0
    %311 = vmatmul.mubr.f32.gmra.mxu0 %v238
    %v312 = vpop.f32.mrf.mxu0
    %v313 = vadd.f32 0.0, %v312
    %v314 = vpop.f32.mrf.mxu0
    %315 = vmatprep.mubr.f32.mxu0 0.0
    %316 = vmatmul.mubr.f32.gmra.mxu0 %v241
    %v317 = vpop.f32.mrf.mxu0
    %v318 = vadd.f32 0.0, %v317
    %v319 = vpop.f32.mrf.mxu0
    %320 = vmatprep.mubr.f32.mxu0 0.0
    %321 = vmatmul.mubr.f32.gmra.mxu0 %v244
    %v322 = vpop.f32.mrf.mxu0
    %v323 = vadd.f32 0.0, %v322
    %v324 = vpop.f32.mrf.mxu0
    %325 = vdwg.mxu0
    %v326 = vsub.f32 %v233, %v313
    %v327 = vsub.f32 %v234, %v318
    %v328 = vsub.f32 %v235, %v323
    %v329 = vmul.f32 %v326, %v326
    %v330 = vmul.f32 %v327, %v327
    %v331 = vmul.f32 %v328, %v328
    %v333 = vsel %vm236, %v329, 0
    %v336 = vsel %vm236, %v330, 0
    %v339 = vsel %vm236, %v331, 0
    %341 = vmatprep.subr.mxu0 0.0
    %342 = vmatpush1.msra.mxu0 0.0
    %343 = vmatprep.subr.mxu0 0.0
    %344 = vmatpush1.msra.mxu0 0.0
    %345 = vmatprep.subr.mxu0 0.0
    %346 = vmatpush1.msra.mxu0 0.0
    %347 = vmatprep.subr.mxu0 0.0
    %348 = vmatpush1.msra.mxu0 0.0
    %349 = vmatprep.subr.mxu0 0.0
    %350 = vmatpush1.msra.mxu0 %v32
    %351 = vmatprep.subr.mxu0 0.0
    %352 = vmatpush1.msra.mxu0 %v31
    %353 = vmatprep.subr.mxu0 0.0
    %354 = vmatpush1.msra.mxu0 %v30
    %355 = vmatprep.subr.mxu0 0.0
    %356 = vmatpush1.msra.mxu0 %v29
    %357 = vmatprep.subr.mxu0 0.0
    %358 = vmatpush1.msra.mxu0 %v28
    %359 = vmatprep.subr.mxu0 0.0
    %360 = vmatpush1.msra.mxu0 %v27
    %361 = vmatprep.subr.mxu0 0.0
    %362 = vmatpush1.msra.mxu0 %v26
    %363 = vmatprep.subr.mxu0 0.0
    %364 = vmatpush1.msra.mxu0 %v25
    %365 = vmatprep.subr.mxu0 0.0
    %366 = vmatpush1.msra.mxu0 %v24
    %367 = vmatprep.subr.mxu0 0.0
    %368 = vmatpush1.msra.mxu0 %v23
    %369 = vmatprep.subr.mxu0 0.0
    %370 = vmatpush1.msra.mxu0 %v22
    %371 = vmatprep.subr.mxu0 0.0
    %372 = vmatpush1.msra.mxu0 %v21
    %373 = vmatprep.subr.mxu0 0.0
    %374 = vmatpush2.msra.mxu0 0.0
    %375 = vmatprep.subr.mxu0 0.0
    %376 = vmatpush2.msra.mxu0 0.0
    %377 = vmatprep.subr.mxu0 0.0
    %378 = vmatpush2.msra.mxu0 0.0
    %379 = vmatprep.subr.mxu0 0.0
    %380 = vmatpush2.msra.mxu0 0.0
    %381 = vmatprep.subr.mxu0 0.0
    %382 = vmatpush2.msra.mxu0 0.0
    %383 = vmatprep.subr.mxu0 0.0
    %384 = vmatpush2.msra.mxu0 0.0
    %385 = vmatprep.subr.mxu0 0.0
    %386 = vmatpush2.msra.mxu0 0.0
    %387 = vmatprep.subr.mxu0 0.0
    %388 = vmatpush2.msra.mxu0 0.0
    %389 = vmatprep.subr.mxu0 0.0
    %390 = vmatpush2.msra.mxu0 0.0
    %391 = vmatprep.subr.mxu0 0.0
    %392 = vmatpush2.msra.mxu0 0.0
    %393 = vmatprep.subr.mxu0 0.0
    %394 = vmatpush2.msra.mxu0 0.0
    %395 = vmatprep.subr.mxu0 0.0
    %396 = vmatpush2.msra.mxu0 0.0
    %397 = vmatprep.subr.mxu0 0.0
    %398 = vmatpush2.msra.mxu0 0.0
    %399 = vmatprep.subr.mxu0 0.0
    %400 = vmatpush2.msra.mxu0 0.0
    %401 = vmatprep.subr.mxu0 0.0
    %402 = vmatpush2.msra.mxu0 0.0
    %403 = vmatprep.subr.mxu0 0.0
    %404 = vmatpush2.msra.mxu0 0.0
    %405 = vmatprep.mubr.f32.mxu0 0.0
    %406 = vmatmul.mubr.f32.gmra.mxu0 %v333
    %v407 = vpop.f32.mrf.mxu0
    %v408 = vadd.f32 1e-05, %v407
    %v409 = vpop.f32.mrf.mxu0
    %410 = vmatprep.mubr.f32.mxu0 0.0
    %411 = vmatmul.mubr.f32.gmra.mxu0 %v336
    %v412 = vpop.f32.mrf.mxu0
    %v413 = vadd.f32 1e-05, %v412
    %v414 = vpop.f32.mrf.mxu0
    %415 = vmatprep.mubr.f32.mxu0 0.0
    %416 = vmatmul.mubr.f32.gmra.mxu0 %v339
    %v417 = vpop.f32.mrf.mxu0
    %v418 = vadd.f32 1e-05, %v417
    %v419 = vpop.f32.mrf.mxu0
    %420 = vdwg.mxu0
    %v421 = vrsqrt.pop %v408
    %v422 = vrsqrt.pop %v413
    %v423 = vrsqrt.pop %v418
    %v424 = vmul.f32 %v326, %v421
    %v425 = vmul.f32 %v327, %v422
    %v426 = vmul.f32 %v328, %v423
    %v427 = vlaneseq
    %v428 = vshrl.u32 %v427, 7
    %v429 = vsub.s32 1, %v428
    %v430 = vrot.slane %v12, %v429
    %v431 = vmul.f32 %v424, %v430
    %v432 = vmul.f32 %v425, %v430
    %v433 = vmul.f32 %v426, %v430
    %v434 = vlaneseq
    %v435 = vshrl.u32 %v434, 7
    %v436 = vsub.s32 2, %v435
    %v437 = vrot.slane %v12, %v436
    %v438 = vadd.f32 %v431, %v437
    %v439 = vadd.f32 %v432, %v437
    %v440 = vadd.f32 %v433, %v437
    %v441 = vmax.f32 %v438, 0.0
    %v442 = vmax.f32 %v439, 0.0
    %v443 = vmax.f32 %v440, 0.0
    %v444 = vlaneseq
    %v445 = vshrl.u32 %v444, 7
    %v446 = vsub.s32 3, %v445
    %v447 = vrot.slane %v12, %v446
    %v449 = vsel %vm236, %v441, 0
    %v452 = vsel %vm236, %v442, 0
    %v455 = vsel %vm236, %v443, 0
    %457 = vmatprep.subr.mxu0 0.0
    %458 = vmatpush1.msra.mxu0 0.0
    %459 = vmatprep.subr.mxu0 0.0
    %460 = vmatpush1.msra.mxu0 0.0
    %461 = vmatprep.subr.mxu0 0.0
    %462 = vmatpush1.msra.mxu0 0.0
    %463 = vmatprep.subr.mxu0 0.0
    %464 = vmatpush1.msra.mxu0 0.0
    %465 = vmatprep.subr.mxu0 0.0
    %466 = vmatpush1.msra.mxu0 %v44
    %467 = vmatprep.subr.mxu0 0.0
    %468 = vmatpush1.msra.mxu0 %v43
    %469 = vmatprep.subr.mxu0 0.0
    %470 = vmatpush1.msra.mxu0 %v42
    %471 = vmatprep.subr.mxu0 0.0
    %472 = vmatpush1.msra.mxu0 %v41
    %473 = vmatprep.subr.mxu0 0.0
    %474 = vmatpush1.msra.mxu0 %v40
    %475 = vmatprep.subr.mxu0 0.0
    %476 = vmatpush1.msra.mxu0 %v39
    %477 = vmatprep.subr.mxu0 0.0
    %478 = vmatpush1.msra.mxu0 %v38
    %479 = vmatprep.subr.mxu0 0.0
    %480 = vmatpush1.msra.mxu0 %v37
    %481 = vmatprep.subr.mxu0 0.0
    %482 = vmatpush1.msra.mxu0 %v36
    %483 = vmatprep.subr.mxu0 0.0
    %484 = vmatpush1.msra.mxu0 %v35
    %485 = vmatprep.subr.mxu0 0.0
    %486 = vmatpush1.msra.mxu0 %v34
    %487 = vmatprep.subr.mxu0 0.0
    %488 = vmatpush1.msra.mxu0 %v33
    %489 = vmatprep.subr.mxu0 0.0
    %490 = vmatpush2.msra.mxu0 0.0
    %491 = vmatprep.subr.mxu0 0.0
    %492 = vmatpush2.msra.mxu0 0.0
    %493 = vmatprep.subr.mxu0 0.0
    %494 = vmatpush2.msra.mxu0 0.0
    %495 = vmatprep.subr.mxu0 0.0
    %496 = vmatpush2.msra.mxu0 0.0
    %497 = vmatprep.subr.mxu0 0.0
    %498 = vmatpush2.msra.mxu0 0.0
    %499 = vmatprep.subr.mxu0 0.0
    %500 = vmatpush2.msra.mxu0 0.0
    %501 = vmatprep.subr.mxu0 0.0
    %502 = vmatpush2.msra.mxu0 0.0
    %503 = vmatprep.subr.mxu0 0.0
    %504 = vmatpush2.msra.mxu0 0.0
    %505 = vmatprep.subr.mxu0 0.0
    %506 = vmatpush2.msra.mxu0 0.0
    %507 = vmatprep.subr.mxu0 0.0
    %508 = vmatpush2.msra.mxu0 0.0
    %509 = vmatprep.subr.mxu0 0.0
    %510 = vmatpush2.msra.mxu0 0.0
    %511 = vmatprep.subr.mxu0 0.0
    %512 = vmatpush2.msra.mxu0 0.0
    %513 = vmatprep.subr.mxu0 0.0
    %514 = vmatpush2.msra.mxu0 0.0
    %515 = vmatprep.subr.mxu0 0.0
    %516 = vmatpush2.msra.mxu0 0.0
    %517 = vmatprep.subr.mxu0 0.0
    %518 = vmatpush2.msra.mxu0 0.0
    %519 = vmatprep.subr.mxu0 0.0
    %520 = vmatpush2.msra.mxu0 0.0
    %521 = vmatprep.mubr.f32.mxu0 0.0
    %522 = vmatmul.mubr.f32.gmra.mxu0 %v449
    %v523 = vpop.f32.mrf.mxu0
    %v524 = vadd.f32 %v447, %v523
    %v525 = vpop.f32.mrf.mxu0
    %526 = vmatprep.mubr.f32.mxu0 0.0
    %527 = vmatmul.mubr.f32.gmra.mxu0 %v452
    %v528 = vpop.f32.mrf.mxu0
    %v529 = vadd.f32 %v447, %v528
    %v530 = vpop.f32.mrf.mxu0
    %531 = vmatprep.mubr.f32.mxu0 0.0
    %532 = vmatmul.mubr.f32.gmra.mxu0 %v455
    %v533 = vpop.f32.mrf.mxu0
    %v534 = vadd.f32 %v447, %v533
    %v535 = vpop.f32.mrf.mxu0
    %536 = vdwg.mxu0
    %v538 = vsel %vm236, %v524, 0
    %v541 = vsel %vm236, %v529, 0
    %v544 = vsel %vm236, %v534, 0
    %546 = vmatprep.subr.mxu0 0.0
    %547 = vmatpush1.msra.mxu0 0.0
    %548 = vmatprep.subr.mxu0 0.0
    %549 = vmatpush1.msra.mxu0 0.0
    %550 = vmatprep.subr.mxu0 0.0
    %551 = vmatpush1.msra.mxu0 0.0
    %552 = vmatprep.subr.mxu0 0.0
    %553 = vmatpush1.msra.mxu0 0.0
    %554 = vmatprep.subr.mxu0 0.0
    %555 = vmatpush1.msra.mxu0 %v32
    %556 = vmatprep.subr.mxu0 0.0
    %557 = vmatpush1.msra.mxu0 %v31
    %558 = vmatprep.subr.mxu0 0.0
    %559 = vmatpush1.msra.mxu0 %v30
    %560 = vmatprep.subr.mxu0 0.0
    %561 = vmatpush1.msra.mxu0 %v29
    %562 = vmatprep.subr.mxu0 0.0
    %563 = vmatpush1.msra.mxu0 %v28
    %564 = vmatprep.subr.mxu0 0.0
    %565 = vmatpush1.msra.mxu0 %v27
    %566 = vmatprep.subr.mxu0 0.0
    %567 = vmatpush1.msra.mxu0 %v26
    %568 = vmatprep.subr.mxu0 0.0
    %569 = vmatpush1.msra.mxu0 %v25
    %570 = vmatprep.subr.mxu0 0.0
    %571 = vmatpush1.msra.mxu0 %v24
    %572 = vmatprep.subr.mxu0 0.0
    %573 = vmatpush1.msra.mxu0 %v23
    %574 = vmatprep.subr.mxu0 0.0
    %575 = vmatpush1.msra.mxu0 %v22
    %576 = vmatprep.subr.mxu0 0.0
    %577 = vmatpush1.msra.mxu0 %v21
    %578 = vmatprep.subr.mxu0 0.0
    %579 = vmatpush2.msra.mxu0 0.0
    %580 = vmatprep.subr.mxu0 0.0
    %581 = vmatpush2.msra.mxu0 0.0
    %582 = vmatprep.subr.mxu0 0.0
    %583 = vmatpush2.msra.mxu0 0.0
    %584 = vmatprep.subr.mxu0 0.0
    %585 = vmatpush2.msra.mxu0 0.0
    %586 = vmatprep.subr.mxu0 0.0
    %587 = vmatpush2.msra.mxu0 0.0
    %588 = vmatprep.subr.mxu0 0.0
    %589 = vmatpush2.msra.mxu0 0.0
    %590 = vmatprep.subr.mxu0 0.0
    %591 = vmatpush2.msra.mxu0 0.0
    %592 = vmatprep.subr.mxu0 0.0
    %593 = vmatpush2.msra.mxu0 0.0
    %594 = vmatprep.subr.mxu0 0.0
    %595 = vmatpush2.msra.mxu0 0.0
    %596 = vmatprep.subr.mxu0 0.0
    %597 = vmatpush2.msra.mxu0 0.0
    %598 = vmatprep.subr.mxu0 0.0
    %599 = vmatpush2.msra.mxu0 0.0
    %600 = vmatprep.subr.mxu0 0.0
    %601 = vmatpush2.msra.mxu0 0.0
    %602 = vmatprep.subr.mxu0 0.0
    %603 = vmatpush2.msra.mxu0 0.0
    %604 = vmatprep.subr.mxu0 0.0
    %605 = vmatpush2.msra.mxu0 0.0
    %606 = vmatprep.subr.mxu0 0.0
    %607 = vmatpush2.msra.mxu0 0.0
    %608 = vmatprep.subr.mxu0 0.0
    %609 = vmatpush2.msra.mxu0 0.0
    %610 = vmatprep.mubr.f32.mxu0 0.0
    %611 = vmatmul.mubr.f32.gmra.mxu0 %v538
    %v612 = vpop.f32.mrf.mxu0
    %v613 = vadd.f32 0.0, %v612
    %v614 = vpop.f32.mrf.mxu0
    %615 = vmatprep.mubr.f32.mxu0 0.0
    %616 = vmatmul.mubr.f32.gmra.mxu0 %v541
    %v617 = vpop.f32.mrf.mxu0
    %v618 = vadd.f32 0.0, %v617
    %v619 = vpop.f32.mrf.mxu0
    %620 = vmatprep.mubr.f32.mxu0 0.0
    %621 = vmatmul.mubr.f32.gmra.mxu0 %v544
    %v622 = vpop.f32.mrf.mxu0
    %v623 = vadd.f32 0.0, %v622
    %v624 = vpop.f32.mrf.mxu0
    %625 = vdwg.mxu0
    %v626 = vsub.f32 %v524, %v613
    %v627 = vsub.f32 %v529, %v618
    %v628 = vsub.f32 %v534, %v623
    %v629 = vmul.f32 %v626, %v626
    %v630 = vmul.f32 %v627, %v627
    %v631 = vmul.f32 %v628, %v628
    %v633 = vsel %vm236, %v629, 0
    %v636 = vsel %vm236, %v630, 0
    %v639 = vsel %vm236, %v631, 0
    %641 = vmatprep.subr.mxu0 0.0
    %642 = vmatpush1.msra.mxu0 0.0
    %643 = vmatprep.subr.mxu0 0.0
    %644 = vmatpush1.msra.mxu0 0.0
    %645 = vmatprep.subr.mxu0 0.0
    %646 = vmatpush1.msra.mxu0 0.0
    %647 = vmatprep.subr.mxu0 0.0
    %648 = vmatpush1.msra.mxu0 0.0
    %649 = vmatprep.subr.mxu0 0.0
    %650 = vmatpush1.msra.mxu0 %v32
    %651 = vmatprep.subr.mxu0 0.0
    %652 = vmatpush1.msra.mxu0 %v31
    %653 = vmatprep.subr.mxu0 0.0
    %654 = vmatpush1.msra.mxu0 %v30
    %655 = vmatprep.subr.mxu0 0.0
    %656 = vmatpush1.msra.mxu0 %v29
    %657 = vmatprep.subr.mxu0 0.0
    %658 = vmatpush1.msra.mxu0 %v28
    %659 = vmatprep.subr.mxu0 0.0
    %660 = vmatpush1.msra.mxu0 %v27
    %661 = vmatprep.subr.mxu0 0.0
    %662 = vmatpush1.msra.mxu0 %v26
    %663 = vmatprep.subr.mxu0 0.0
    %664 = vmatpush1.msra.mxu0 %v25
    %665 = vmatprep.subr.mxu0 0.0
    %666 = vmatpush1.msra.mxu0 %v24
    %667 = vmatprep.subr.mxu0 0.0
    %668 = vmatpush1.msra.mxu0 %v23
    %669 = vmatprep.subr.mxu0 0.0
    %670 = vmatpush1.msra.mxu0 %v22
    %671 = vmatprep.subr.mxu0 0.0
    %672 = vmatpush1.msra.mxu0 %v21
    %673 = vmatprep.subr.mxu0 0.0
    %674 = vmatpush2.msra.mxu0 0.0
    %675 = vmatprep.subr.mxu0 0.0
    %676 = vmatpush2.msra.mxu0 0.0
    %677 = vmatprep.subr.mxu0 0.0
    %678 = vmatpush2.msra.mxu0 0.0
    %679 = vmatprep.subr.mxu0 0.0
    %680 = vmatpush2.msra.mxu0 0.0
    %681 = vmatprep.subr.mxu0 0.0
    %682 = vmatpush2.msra.mxu0 0.0
    %683 = vmatprep.subr.mxu0 0.0
    %684 = vmatpush2.msra.mxu0 0.0
    %685 = vmatprep.subr.mxu0 0.0
    %686 = vmatpush2.msra.mxu0 0.0
    %687 = vmatprep.subr.mxu0 0.0
    %688 = vmatpush2.msra.mxu0 0.0
    %689 = vmatprep.subr.mxu0 0.0
    %690 = vmatpush2.msra.mxu0 0.0
    %691 = vmatprep.subr.mxu0 0.0
    %692 = vmatpush2.msra.mxu0 0.0
    %693 = vmatprep.subr.mxu0 0.0
    %694 = vmatpush2.msra.mxu0 0.0
    %695 = vmatprep.subr.mxu0 0.0
    %696 = vmatpush2.msra.mxu0 0.0
    %697 = vmatprep.subr.mxu0 0.0
    %698 = vmatpush2.msra.mxu0 0.0
    %699 = vmatprep.subr.mxu0 0.0
    %700 = vmatpush2.msra.mxu0 0.0
    %701 = vmatprep.subr.mxu0 0.0
    %702 = vmatpush2.msra.mxu0 0.0
    %703 = vmatprep.subr.mxu0 0.0
    %704 = vmatpush2.msra.mxu0 0.0
    %705 = vmatprep.mubr.f32.mxu0 0.0
    %706 = vmatmul.mubr.f32.gmra.mxu0 %v633
    %v707 = vpop.f32.mrf.mxu0
    %v708 = vadd.f32 1e-05, %v707
    %v709 = vpop.f32.mrf.mxu0
    %710 = vmatprep.mubr.f32.mxu0 0.0
    %711 = vmatmul.mubr.f32.gmra.mxu0 %v636
    %v712 = vpop.f32.mrf.mxu0
    %v713 = vadd.f32 1e-05, %v712
    %v714 = vpop.f32.mrf.mxu0
    %715 = vmatprep.mubr.f32.mxu0 0.0
    %716 = vmatmul.mubr.f32.gmra.mxu0 %v639
    %v717 = vpop.f32.mrf.mxu0
    %v718 = vadd.f32 1e-05, %v717
    %v719 = vpop.f32.mrf.mxu0
    %720 = vdwg.mxu0
    %v721 = vrsqrt.pop %v708
    %v722 = vrsqrt.pop %v713
    %v723 = vrsqrt.pop %v718
    %v724 = vmul.f32 %v626, %v721
    %v725 = vmul.f32 %v627, %v722
    %v726 = vmul.f32 %v628, %v723
    %v727 = vlaneseq
    %v728 = vshrl.u32 %v727, 7
    %v729 = vsub.s32 4, %v728
    %v730 = vrot.slane %v12, %v729
    %v731 = vmul.f32 %v724, %v730
    %v732 = vmul.f32 %v725, %v730
    %v733 = vmul.f32 %v726, %v730
    %v734 = vlaneseq
    %v735 = vshrl.u32 %v734, 7
    %v736 = vsub.s32 5, %v735
    %v737 = vrot.slane %v12, %v736
    %v738 = vadd.f32 %v731, %v737
    %v739 = vadd.f32 %v732, %v737
    %v740 = vadd.f32 %v733, %v737
    %v741 = vmax.f32 %v738, 0.0
    %v742 = vmax.f32 %v739, 0.0
    %v743 = vmax.f32 %v740, 0.0
    %v744 = vlaneseq
    %v745 = vshrl.u32 %v744, 7
    %v746 = vsub.s32 6, %v745
    %v747 = vrot.slane %v12, %v746
    %v749 = vsel %vm236, %v741, 0
    %v752 = vsel %vm236, %v742, 0
    %v755 = vsel %vm236, %v743, 0
    %757 = vmatprep.subr.mxu0 0.0
    %758 = vmatpush1.msra.mxu0 0.0
    %759 = vmatprep.subr.mxu0 0.0
    %760 = vmatpush1.msra.mxu0 0.0
    %761 = vmatprep.subr.mxu0 0.0
    %762 = vmatpush1.msra.mxu0 0.0
    %763 = vmatprep.subr.mxu0 0.0
    %764 = vmatpush1.msra.mxu0 0.0
    %765 = vmatprep.subr.mxu0 0.0
    %766 = vmatpush1.msra.mxu0 %v56
    %767 = vmatprep.subr.mxu0 0.0
    %768 = vmatpush1.msra.mxu0 %v55
    %769 = vmatprep.subr.mxu0 0.0
    %770 = vmatpush1.msra.mxu0 %v54
    %771 = vmatprep.subr.mxu0 0.0
    %772 = vmatpush1.msra.mxu0 %v53
    %773 = vmatprep.subr.mxu0 0.0
    %774 = vmatpush1.msra.mxu0 %v52
    %775 = vmatprep.subr.mxu0 0.0
    %776 = vmatpush1.msra.mxu0 %v51
    %777 = vmatprep.subr.mxu0 0.0
    %778 = vmatpush1.msra.mxu0 %v50
    %779 = vmatprep.subr.mxu0 0.0
    %780 = vmatpush1.msra.mxu0 %v49
    %781 = vmatprep.subr.mxu0 0.0
    %782 = vmatpush1.msra.mxu0 %v48
    %783 = vmatprep.subr.mxu0 0.0
    %784 = vmatpush1.msra.mxu0 %v47
    %785 = vmatprep.subr.mxu0 0.0
    %786 = vmatpush1.msra.mxu0 %v46
    %787 = vmatprep.subr.mxu0 0.0
    %788 = vmatpush1.msra.mxu0 %v45
    %789 = vmatprep.subr.mxu0 0.0
    %790 = vmatpush2.msra.mxu0 0.0
    %791 = vmatprep.subr.mxu0 0.0
    %792 = vmatpush2.msra.mxu0 0.0
    %793 = vmatprep.subr.mxu0 0.0
    %794 = vmatpush2.msra.mxu0 0.0
    %795 = vmatprep.subr.mxu0 0.0
    %796 = vmatpush2.msra.mxu0 0.0
    %797 = vmatprep.subr.mxu0 0.0
    %798 = vmatpush2.msra.mxu0 0.0
    %799 = vmatprep.subr.mxu0 0.0
    %800 = vmatpush2.msra.mxu0 0.0
    %801 = vmatprep.subr.mxu0 0.0
    %802 = vmatpush2.msra.mxu0 0.0
    %803 = vmatprep.subr.mxu0 0.0
    %804 = vmatpush2.msra.mxu0 0.0
    %805 = vmatprep.subr.mxu0 0.0
    %806 = vmatpush2.msra.mxu0 0.0
    %807 = vmatprep.subr.mxu0 0.0
    %808 = vmatpush2.msra.mxu0 0.0
    %809 = vmatprep.subr.mxu0 0.0
    %810 = vmatpush2.msra.mxu0 0.0
    %811 = vmatprep.subr.mxu0 0.0
    %812 = vmatpush2.msra.mxu0 0.0
    %813 = vmatprep.subr.mxu0 0.0
    %814 = vmatpush2.msra.mxu0 0.0
    %815 = vmatprep.subr.mxu0 0.0
    %816 = vmatpush2.msra.mxu0 0.0
    %817 = vmatprep.subr.mxu0 0.0
    %818 = vmatpush2.msra.mxu0 0.0
    %819 = vmatprep.subr.mxu0 0.0
    %820 = vmatpush2.msra.mxu0 0.0
    %821 = vmatprep.mubr.f32.mxu0 0.0
    %822 = vmatmul.mubr.f32.gmra.mxu0 %v749
    %v823 = vpop.f32.mrf.mxu0
    %v824 = vadd.f32 %v747, %v823
    %v825 = vpop.f32.mrf.mxu0
    %826 = vmatprep.mubr.f32.mxu0 0.0
    %827 = vmatmul.mubr.f32.gmra.mxu0 %v752
    %v828 = vpop.f32.mrf.mxu0
    %v829 = vadd.f32 %v747, %v828
    %v830 = vpop.f32.mrf.mxu0
    %831 = vmatprep.mubr.f32.mxu0 0.0
    %832 = vmatmul.mubr.f32.gmra.mxu0 %v755
    %v833 = vpop.f32.mrf.mxu0
    %v834 = vadd.f32 %v747, %v833
    %v835 = vpop.f32.mrf.mxu0
    %836 = vdwg.mxu0
    %vm837 = vcmp.gt.f32.partialorder %v824, 0.0
    %vm838 = vcmp.gt.f32.partialorder %v829, 0.0
    %vm839 = vcmp.gt.f32.partialorder %v834, 0.0
    %v840 = vmin.f32 %v824, 0.0
    %v841 = vmin.f32 %v829, 0.0
    %v842 = vmin.f32 %v834, 0.0
    %v843 = vmul.f32 %v840, 1.442695
    %v844 = vpow.pop %v843
    %v845 = vmul.f32 %v841, 1.442695
    %v846 = vpow.pop %v845
    %v847 = vmul.f32 %v842, 1.442695
    %v848 = vpow.pop %v847
    %v849 = vsub.f32 %v844, 1.0
    %v850 = vsub.f32 %v846, 1.0
    %v851 = vsub.f32 %v848, 1.0
    %v852 = vsel %vm837, %v824, %v849
    %v853 = vsel %vm838, %v829, %v850
    %v854 = vsel %vm839, %v834, %v851
    %vm855 = vcmp.gt.f32.partialorder %v12, 0.0
    %v856 = vadd.f32 %v852, 1.001
    %v857 = vadd.f32 %v853, 1.001
    %v858 = vadd.f32 %v854, 1.001
    %v859 = vsel %vm855, 1, 0
    %v860 = vlaneseq
    %v861 = vshrl.u32 %v860, 7
    %v862 = vsub.s32 7, %v861
    %v863 = vrot.slane %v859, %v862
    %vm864 = vcmp.eq.s32.totalorder %v863, 1
    %v865 = vsel %vm864, %v856, %v824
    %v866 = vsel %vm864, %v857, %v829
    %v867 = vsel %vm864, %v858, %v834
    %868 = vst.msk [vmem:[#allocation2] sm:$0xff] %vm236, %v865
    %869 = vst.msk [vmem:[#allocation2 + $0x8] sm:$0xff] %vm236, %v866
    %870 = vst.msk [vmem:[#allocation2 + $0x10] sm:$0xff] %vm236, %v867
    // Predicated region
    $region10: #{tpu_custom_call.1} parent=1 // pred_check
      _
    $region11: #{tpu_custom_call.1} parent=1 // pred_check_branch
      %872 = sbr.rel (0) target = $region13
    $region12: #{tpu_custom_call.1} parent=1 // pred_region
      %s874 = ssub.s32 384, 384
      %875 = vsyncadd [#allocation3], %s874
      %s876 = sshll.u32 [#allocation2], 4
      %s877 = int_to_ptr.vmem [resolvable:$true] %s876
      %882 = dma.vmem_to_hbm [thread:$0]  %s877, 384, %s2, [#allocation3], 128, 128, 8
    $region13: #{tpu_custom_call.1} parent=1 // pred_fallthru
      _
    // Predicated region
    $region14: #{tpu_custom_call.1} parent=1 // pred_check
      _
    $region15: #{tpu_custom_call.1} parent=1 // pred_check_branch
      %884 = sbr.rel (0) target = $region17
    $region16: #{tpu_custom_call.1} parent=1 // pred_region
      %885 = dma.done [#allocation3], 384
    $region17: #{tpu_custom_call.1} parent=1 // pred_fallthru
      _
    %886 = vsyncpa [#allocation3], 1

</llo_original>
